<compile_context>
chip_gen: v7x
topology: tpu7x:2x2x1
jax: 0.10.0
libtpu: 0.0.40
codegen_flags: <defaults>
</compile_context>

<pallas_src>
import functools

import jax
import jax.numpy as jnp
from jax import lax
from jax.experimental import pallas as pl
from jax.experimental.pallas import tpu as pltpu


# -----------------------------------------------------------------------------
# Kernel
# -----------------------------------------------------------------------------
def _diversity_gram_kernel(layer_ref, out_ref, *, metric, dl, num_k,
                           kk_per_core, mask_last, skip_extra):
    """Accumulate, per TensorCore, either the layer Gram matrix (l2 / cosine)
    or the pairwise |diff| column sums (l1) over a stream of Dl tiles, directly
    into the resident (N, N) f32 output block."""
    n, tk = layer_ref.shape
    kk = pl.program_id(1)                       # Dl tile index within this core
    k = pl.program_id(0) * kk_per_core + kk     # logical Dl tile index

    # ---- init the resident output accumulator at this core's first tile ------
    @pl.when(kk == 0)
    def _init():
        out_ref[...] = jnp.zeros_like(out_ref)

    # ---- per-tile accumulation -----------------------------------------------
    def _accum(masked):
        lt = layer_ref[...]                     # (N, TK), native dtype
        if masked:
            # Only the final (partial) Dl tile is masked; bound is static.
            valid_cols = dl - (num_k - 1) * tk
            col = lax.broadcasted_iota(jnp.int32, (n, tk), 1)
            lt = jnp.where(col < valid_cols, lt, jnp.zeros_like(lt))

        if metric == 'l1':
            # VPU path: subtract/abs in the native dtype (bf16-native VALU on
            # v6e/v7x), f32 lane reduce, ONE (N, N) accumulator RMW per tile.
            # TODO(synk): for large static N switch this Python unroll to
            # lax.fori_loop(..., unroll=True) to bound code size / live ranges.
            cols = []
            for i in range(n):
                ri = lt[i:i + 1, :]             # (1, TK) row i
                cols.append(jnp.sum(jnp.abs(lt - ri).astype(jnp.float32),
                                    axis=-1, keepdims=True))
            out_ref[...] += jnp.concatenate(cols, axis=1)
        else:
            # Transpose-free Gram on the MXU, f32 accumulation.  Used for every
            # N: the kernel is HBM-bound, so the MXU work is free and keeps the
            # VALU / XLU / vst slots clear.
            out_ref[...] += lax.dot_general(
                lt, lt, dimension_numbers=(((1,), (1,)), ((), ())),
                preferred_element_type=jnp.float32)

    def _accum_unmasked():
        _accum(False)

    def _accum_masked():
        _accum(True)

    if mask_last:
        is_last = k == num_k - 1
        if skip_extra:
            valid = k < num_k                   # overhang tiles of the 2-way split
            pl.when(jnp.logical_and(valid, jnp.logical_not(is_last)))(_accum_unmasked)
            pl.when(jnp.logical_and(valid, is_last))(_accum_masked)
        else:
            pl.when(jnp.logical_not(is_last))(_accum_unmasked)
            pl.when(is_last)(_accum_masked)
    else:
        if skip_extra:
            pl.when(k < num_k)(_accum_unmasked)
        else:
            _accum_unmasked()


# -----------------------------------------------------------------------------
# Wrapper
# -----------------------------------------------------------------------------
def _detect_num_tensorcores():
    """2 only on multi-TensorCore chips (v7x); 1 on v5e / v6e."""
    try:
        kind = (getattr(jax.devices()[0], 'device_kind', '') or '').lower()
        if 'v7' in kind or '7x' in kind:
            return 2
    except Exception:
        pass
    return 1


def _vmem_capacity_bytes():
    try:
        cap = getattr(pltpu.get_tpu_info(), 'vmem_capacity_bytes', None)
        if cap:
            return int(cap)
    except Exception:
        pass
    return 64 * 1024 * 1024     # conservative default = v7x physical VMEM


def diversity_loss(noises, layer, metric='l2', *, max_tile_k=None):
    """Pallas implementation of DiversityLoss(metric).forward(noises, layer)."""
    if metric not in ('l1', 'l2', 'cosine'):
        raise ValueError(metric)
    if layer.ndim > 2:
        layer = layer.reshape(layer.shape[0], -1)
    n, dl = layer.shape
    assert noises.shape[0] == n

    # ---- Dl tile sizing from a VMEM byte budget -------------------------------
    itemsize = jnp.dtype(layer.dtype).itemsize
    vmem_cap = _vmem_capacity_bytes()
    # Streamed layer tile is double-buffered; keep total footprint well inside
    # physical VMEM (64 MiB v7x, 128 MiB v5e/v6e).
    scoped_budget = min(int(vmem_cap * 0.65), 88 * 1024 * 1024)
    per_buffer = max(scoped_budget // 2, 1 << 20)
    budget_cols = per_buffer // max(n * itemsize, 1)
    tk = max(128, (budget_cols // 128) * 128)
    if max_tile_k is not None:
        tk = min(tk, max(128, (max_tile_k // 128) * 128))
    if dl <= tk:
        tk = dl                     # single full-width tile (block == full dim)
    num_k = pl.cdiv(dl, tk)

    # ---- 2-way Dl split only on multi-TensorCore chips (v7x) ------------------
    p_cores = 2 if (_detect_num_tensorcores() >= 2 and num_k >= 2) else 1
    if p_cores > 1 and num_k % p_cores != 0:
        # Try to avoid the wasted overhang-tile DMA by choosing an even num_k.
        target = ((num_k + p_cores - 1) // p_cores) * p_cores
        tk_try = max(128, ((pl.cdiv(dl, target) + 127) // 128) * 128)
        if pl.cdiv(dl, tk_try) % p_cores == 0:
            tk = tk_try
            num_k = pl.cdiv(dl, tk)
    kk_per_core = pl.cdiv(num_k, p_cores)
    skip_extra = (p_cores * kk_per_core != num_k)
    mask_last = (dl % tk != 0)

    kernel = functools.partial(
        _diversity_gram_kernel, metric=metric, dl=dl, num_k=num_k,
        kk_per_core=kk_per_core, mask_last=mask_last, skip_extra=skip_extra)

    def layer_index_map(p, kk):
        k = p * kk_per_core + kk
        if skip_extra:              # clamp the (skipped) overhang tiles
            k = jnp.minimum(k, num_k - 1)
        return (0, k)

    # Explicit scoped-VMEM limit: 2 layer buffers + (double-buffered) output.
    vmem_limit = 2 * n * tk * itemsize + 2 * n * n * 4 + (8 << 20)
    vmem_limit = max(32 << 20, min(vmem_limit, int(vmem_cap * 0.9), 100 << 20))

    if p_cores > 1:
        lead = getattr(pltpu, 'CORE_PARALLEL', None)
        if lead is not None:
            dim_sems = (lead, getattr(pltpu, 'ARBITRARY', 'arbitrary'))
        else:
            dim_sems = ('parallel', 'arbitrary')
    else:
        dim_sems = ('arbitrary', 'arbitrary')

    partials = pl.pallas_call(
        kernel,
        out_shape=jax.ShapeDtypeStruct((p_cores, n, n), jnp.float32),
        grid_spec=pltpu.PrefetchScalarGridSpec(
            num_scalar_prefetch=0,
            grid=(p_cores, kk_per_core),
            in_specs=[pl.BlockSpec((n, tk), layer_index_map)],     # streamed layer
            out_specs=pl.BlockSpec((None, n, n), lambda p, kk: (p, 0, 0)),
        ),
        compiler_params=pltpu.CompilerParams(
            dimension_semantics=dim_sems,
            vmem_limit_bytes=int(vmem_limit)),
    )(layer)

    # ---- O(N^2) finalize in plain JAX (runs once, not per core) ---------------
    acc = jnp.sum(partials, axis=0)          # Gram (l2/cosine) or L1 column sums
    if metric == 'l1':
        layer_dist = acc / dl
    elif metric == 'l2':
        diag = jnp.diagonal(acc)
        layer_dist = jnp.maximum(diag[:, None] + diag[None, :] - 2.0 * acc,
                                 0.0) / dl
    else:  # cosine — torch.nn.CosineSimilarity clamps the norm product at 1e-8
        diag = jnp.maximum(jnp.diagonal(acc), 0.0)
        denom = jnp.maximum(jnp.sqrt(diag[:, None] * diag[None, :]), 1e-8)
        layer_dist = 1.0 - acc / denom

    x = noises.astype(jnp.float32)
    noise_dist = jnp.mean((x[None, :, :] - x[:, None, :]) ** 2, axis=2)
    return jnp.exp(jnp.mean(-noise_dist * layer_dist))


# -----------------------------------------------------------------------------
# Pure-JAX reference (mirror of the PyTorch module) and self-test
# -----------------------------------------------------------------------------
def _reference(noises, layer, metric):
    if layer.ndim > 2:
        layer = layer.reshape(layer.shape[0], -1)

    def pdist(t, how):
        t1 = t[None, :, :]      # expand: [i, j, :] = t[j]
        t2 = t[:, None, :]      # unsqueeze(1): [i, j, :] = t[i]
        if how == 'l1':
            return jnp.mean(jnp.abs(t1 - t2), axis=2)
        if how == 'l2':
            return jnp.mean((t1 - t2) ** 2, axis=2)
        if how == 'cosine':
            num = jnp.sum(t1 * t2, axis=2)
            den = jnp.maximum(
                jnp.linalg.norm(t1, axis=2) * jnp.linalg.norm(t2, axis=2), 1e-8)
            return 1.0 - num / den
        raise ValueError(how)

    layer_dist = pdist(layer, metric)
    noise_dist = pdist(noises, 'l2')
    return jnp.exp(jnp.mean(-noise_dist * layer_dist))


if __name__ == "__main__":
    key = jax.random.PRNGKey(0)
    k_noise, k_layer, k_wide = jax.random.split(key, 3)

    # Module-consistent small shapes: N=4 generator noises of dim 32,
    # layer = NCHW conv activations (4, 4, 16, 16) flattened inside forward.
    noises = jax.random.normal(k_noise, (4, 32), dtype=jnp.float32)
    layer = jax.random.normal(k_layer, (4, 4, 16, 16), dtype=jnp.float32)

    for metric in ('l2', 'cosine', 'l1'):
        out = diversity_loss(noises, layer, metric=metric)
        jax.block_until_ready(out)
        ref = _reference(noises, layer, metric)
        assert jnp.allclose(out, ref, rtol=1e-4, atol=1e-5), (metric, out, ref)

    # Exercise the streamed path: small tiles on a non-multiple Dl so the
    # multi-tile pipeline, last-tile-only masking and (on v7x) the 2-way
    # CORE_PARALLEL split all run.
    layer_wide = jax.random.normal(k_wide, (4, 600), dtype=jnp.float32)
    for metric in ('l2', 'cosine', 'l1'):
        out = diversity_loss(noises, layer_wide, metric=metric, max_tile_k=256)
        jax.block_until_ready(out)
        ref = _reference(noises, layer_wide, metric)
        assert jnp.allclose(out, ref, rtol=1e-4, atol=1e-5), (metric, out, ref)

    print("KERNEL_OK")
</pallas_src>

<mosaic_0001>
module attributes {stable_mosaic.version = 11 : i64} {
  func.func @_diversity_gram_kernel(%arg0: i32, %arg1: i32, %arg2: memref<4x1024xf32, #tpu.memory_space<vmem>>, %arg3: memref<1x4x4xf32, #tpu.memory_space<vmem>>) attributes {dimension_semantics = [#tpu.dimension_semantics<arbitrary>, #tpu.dimension_semantics<arbitrary>], iteration_bounds = array<i64: 1, 1>, scalar_prefetch = 0 : i64, scratch_operands = 0 : i64, tpu.core_type = #tpu.core_type<tc>, window_params = [{transform_indices = @transform_0, window_bounds = array<i64: 4, 1024>}, {transform_indices = @transform_1, window_bounds = array<i64: 1, 4, 4>}]} {
    %c0_i32 = arith.constant 0 : i32
    %0 = arith.cmpi eq, %arg1, %c0_i32 : i32
    %1 = arith.extui %0 : i1 to i32
    %c0_i32_0 = arith.constant 0 : i32
    %2 = arith.cmpi ne, %1, %c0_i32_0 : i32
    scf.if %2 {
      %cst_8 = arith.constant 0.000000e+00 : f32
      %11 = vector.broadcast %cst_8 : f32 to vector<4x4xf32>
      %c0_9 = arith.constant 0 : index
      %c0_10 = arith.constant 0 : index
      %c0_11 = arith.constant 0 : index
      %12 = vector.load %arg3[%c0_9, %c0_10, %c0_11] : memref<1x4x4xf32, #tpu.memory_space<vmem>>, vector<1x4x4xf32>
      %13 = vector.shape_cast %12 : vector<1x4x4xf32> to vector<4x4xf32>
      %14 = vector.shape_cast %11 : vector<4x4xf32> to vector<1x4x4xf32>
      tpu.vector_store %arg3[%c0_9, %c0_10, %c0_11], %14 {strides = array<i32>} : memref<1x4x4xf32, #tpu.memory_space<vmem>>, vector<1x4x4xf32>,
    } else {
    }
    %c0 = arith.constant 0 : index
    %c0_1 = arith.constant 0 : index
    %3 = vector.load %arg2[%c0, %c0_1] : memref<4x1024xf32, #tpu.memory_space<vmem>>, vector<4x1024xf32>
    %c0_2 = arith.constant 0 : index
    %c0_3 = arith.constant 0 : index
    %c0_4 = arith.constant 0 : index
    %4 = vector.load %arg3[%c0_2, %c0_3, %c0_4] : memref<1x4x4xf32, #tpu.memory_space<vmem>>, vector<1x4x4xf32>
    %5 = vector.shape_cast %4 : vector<1x4x4xf32> to vector<4x4xf32>
    %cst = arith.constant dense<0.000000e+00> : vector<4x4xf32>
    %6 = tpu.matmul %3, %3, %cst {dimension_numbers = #tpu.dot_dimension_numbers<[1], [1], [0], [0], [0, 0, 1, 0], [], []>} : vector<4x1024xf32>, vector<4x1024xf32>, vector<4x4xf32> -> vector<4x4xf32>
    %7 = arith.addf %5, %6 : vector<4x4xf32>
    %c0_5 = arith.constant 0 : index
    %c0_6 = arith.constant 0 : index
    %c0_7 = arith.constant 0 : index
    %8 = vector.load %arg3[%c0_5, %c0_6, %c0_7] : memref<1x4x4xf32, #tpu.memory_space<vmem>>, vector<1x4x4xf32>
    %9 = vector.shape_cast %8 : vector<1x4x4xf32> to vector<4x4xf32>
    %10 = vector.shape_cast %7 : vector<4x4xf32> to vector<1x4x4xf32>
    tpu.vector_store %arg3[%c0_5, %c0_6, %c0_7], %10 {strides = array<i32>} : memref<1x4x4xf32, #tpu.memory_space<vmem>>, vector<1x4x4xf32>,
    return
  }
  func.func @transform_0(%arg0: i32, %arg1: i32) -> (i32, i32) {
    %c1_i32 = arith.constant 1 : i32
    %0 = arith.muli %arg0, %c1_i32 : i32
    %1 = arith.addi %0, %arg1 : i32
    %c0_i32 = arith.constant 0 : i32
    %c0_i32_0 = arith.constant 0 : i32
    return %c0_i32, %1 : i32, i32
  }
  func.func @transform_1(%arg0: i32, %arg1: i32) -> (i32, i32, i32) {
    %c0_i32 = arith.constant 0 : i32
    %c0_i32_0 = arith.constant 0 : i32
    %c0_i32_1 = arith.constant 0 : i32
    return %arg0, %c0_i32, %c0_i32_0 : i32, i32, i32
  }
}

</mosaic_0001>

<llo_original>
// kernel: tpu_custom_call.1
$region0: #{tpu_custom_call.1}
  #allocation0 [shape = 'u32[]', space=smem, size = 0x4, offset = 0x4, fixed_abs, tag = 'smem constant byte address 0x4 - core index']
  #allocation1 [shape = 'u32[144,128]{1,0:T(1,128)}', space=vmem, size = 0x12000, scoped, tag = 'internal scratch']
  %s0 = inlined_call_operand.hbm [shape: f32[4,1024], index: 0, kind: input, shape index: {}]
  %s1 = inlined_call_operand.hbm [shape: f32[1,4,4], index: 1, kind: output, shape index: {}]
  %s2 = sld [smem:[#allocation0]]
  $region22: #{tpu_custom_call.1} parent=0
    _
  %s4 = ssub.s32 1, %s2
  %s5 = scalar_select 0, %s4, %s2
  $region1: #{tpu_custom_call.1} parent=0
    #allocation2 [shape = 'u8[16384]{0}', space=vmem, size = 0x4000, scoped, tag = 'input window, operand 0, single buffered']
    #allocation3 [shape = 's32[1]{0}', space=sflag, size = 0x4, scoped, tag = 'scoped memory for tpu_custom_call.1']
    #allocation4 [shape = 's32[1]{0}', space=sflag, size = 0x4, scoped, tag = 'scoped memory for tpu_custom_call.1']
    #allocation5 [shape = 'u8[2048]{0}', space=vmem, size = 0x800, scoped, tag = 'output window, operand 0, single buffered']
    %6 = vsyncpa [#allocation3], 0
    %7 = vsyncpa [#allocation4], 0
    // Predicated region
    $region2: #{tpu_custom_call.1} parent=1 // pred_check
      _
    $region3: #{tpu_custom_call.1} parent=1 // pred_check_branch
      %9 = sbr.rel (0) target = $region5
    $region4: #{tpu_custom_call.1} parent=1 // pred_region
      %s10 = sadd.s32 0, 0
      %s11 = smul.u32 8, %s10
      %s13 = ssub.s32 512, 512
      %14 = vsyncadd [#allocation3], %s13
      %s15 = smul.addr %s11, 64
      %s16 = scalar_lea.hbm %s0, %s15
      %s18 = sshll.u32 [#allocation2], 4
      %s19 = int_to_ptr.vmem [resolvable:$true] %s18
      %21 = dma.hbm_to_vmem [thread:$0]  %s16, 512, %s19, [#allocation3]
    $region5: #{tpu_custom_call.1} parent=1 // pred_fallthru
      _
    // Predicated region
    $region6: #{tpu_custom_call.1} parent=1 // pred_check
      _
    $region7: #{tpu_custom_call.1} parent=1 // pred_check_branch
      %23 = sbr.rel (0) target = $region9
    $region8: #{tpu_custom_call.1} parent=1 // pred_region
      %24 = dma.done [#allocation3], 512
    $region9: #{tpu_custom_call.1} parent=1 // pred_fallthru
      _
    %s25 = sadd.s32 0, 0
    %s26 = smul.u32 8, %s25
    %p27 = scmp.eq.s32.totalorder 0, 0
    // Predicated region
    $region10: #{tpu_custom_call.1} parent=1 // pred_check
      %p28 = pneg %p27
    $region11: #{tpu_custom_call.1} parent=1 // pred_check_branch
      %30 = sbr.rel (%p28) target = $region13
    $region12: #{tpu_custom_call.1} parent=1 // pred_region
      %vm31 = vcmask 27648
      %32 = vst.msk [vmem:[#allocation5] sm:$0xf] %vm31, 0.0
    $region13: #{tpu_custom_call.1} parent=1 // pred_fallthru
      _
    %v33 = vld [vmem:[#allocation2] sm:$0xff]
    %v34 = vld [vmem:[#allocation2 + $0x8] sm:$0xff]
    %v35 = vld [vmem:[#allocation2 + $0x10] sm:$0xff]
    %v36 = vld [vmem:[#allocation2 + $0x18] sm:$0xff]
    %v37 = vld [vmem:[#allocation5] sm:$0xf]
    %v42 = vcombine.high %v33, %v33
    %v43 = vcombine.high %v34, %v34
    %v44 = vcombine.high %v35, %v35
    %v45 = vcombine.high %v36, %v36
    %50 = vmatprep.subr.mxu0 %v42
    %51 = vmatpush1.xpose.msra.mxu0 %v33
    %52 = vmatprep.subr.mxu0 0.0
    %53 = vmatpush1.xpose.msra.mxu0 0.0
    %54 = vmatprep.subr.mxu0 0.0
    %55 = vmatpush1.xpose.msra.mxu0 0.0
    %56 = vmatprep.subr.mxu0 0.0
    %57 = vmatpush1.xpose.msra.mxu0 0.0
    %58 = vmatprep.subr.mxu0 0.0
    %59 = vmatpush1.xpose.msra.mxu0 0.0
    %60 = vmatprep.subr.mxu0 0.0
    %61 = vmatpush1.xpose.msra.mxu0 0.0
    %62 = vmatprep.subr.mxu0 0.0
    %63 = vmatpush1.xpose.msra.mxu0 0.0
    %64 = vmatprep.subr.mxu0 0.0
    %65 = vmatpush1.xpose.msra.mxu0 0.0
    %66 = vmatprep.subr.mxu0 0.0
    %67 = vmatpush1.xpose.msra.mxu0 0.0
    %68 = vmatprep.subr.mxu0 0.0
    %69 = vmatpush1.xpose.msra.mxu0 0.0
    %70 = vmatprep.subr.mxu0 0.0
    %71 = vmatpush1.xpose.msra.mxu0 0.0
    %72 = vmatprep.subr.mxu0 0.0
    %73 = vmatpush1.xpose.msra.mxu0 0.0
    %74 = vmatprep.subr.mxu0 0.0
    %75 = vmatpush1.xpose.msra.mxu0 0.0
    %76 = vmatprep.subr.mxu0 0.0
    %77 = vmatpush1.xpose.msra.mxu0 0.0
    %78 = vmatprep.subr.mxu0 0.0
    %79 = vmatpush1.xpose.msra.mxu0 0.0
    %80 = vmatprep.subr.mxu0 0.0
    %81 = vmatpush1.xpose.msra.mxu0 0.0
    %82 = vmatprep.subr.mxu0 0.0
    %83 = vmatpush1.xpose.msra.mxu0 0.0
    %84 = vmatprep.subr.mxu0 0.0
    %85 = vmatpush1.xpose.msra.mxu0 0.0
    %86 = vmatprep.subr.mxu0 0.0
    %87 = vmatpush1.xpose.msra.mxu0 0.0
    %88 = vmatprep.subr.mxu0 0.0
    %89 = vmatpush1.xpose.msra.mxu0 0.0
    %90 = vmatprep.subr.mxu0 0.0
    %91 = vmatpush1.xpose.msra.mxu0 0.0
    %92 = vmatprep.subr.mxu0 0.0
    %93 = vmatpush1.xpose.msra.mxu0 0.0
    %94 = vmatprep.subr.mxu0 0.0
    %95 = vmatpush1.xpose.msra.mxu0 0.0
    %96 = vmatprep.subr.mxu0 0.0
    %97 = vmatpush1.xpose.msra.mxu0 0.0
    %98 = vmatprep.subr.mxu0 0.0
    %99 = vmatpush1.xpose.msra.mxu0 0.0
    %100 = vmatprep.subr.mxu0 0.0
    %101 = vmatpush1.xpose.msra.mxu0 0.0
    %102 = vmatprep.subr.mxu0 0.0
    %103 = vmatpush1.xpose.msra.mxu0 0.0
    %104 = vmatprep.subr.mxu0 0.0
    %105 = vmatpush1.xpose.msra.mxu0 0.0
    %106 = vmatprep.subr.mxu0 0.0
    %107 = vmatpush1.xpose.msra.mxu0 0.0
    %108 = vmatprep.subr.mxu0 0.0
    %109 = vmatpush1.xpose.msra.mxu0 0.0
    %110 = vmatprep.subr.mxu0 0.0
    %111 = vmatpush1.xpose.msra.mxu0 0.0
    %112 = vmatprep.subr.mxu0 0.0
    %113 = vmatpush1.xpose.msra.mxu0 0.0
    %114 = vmatprep.mubr.f32.mxu0 %v42
    %115 = vmatmul.mubr.f32.gmra.mrb[0].mxu0 %v33
    %v116 = vpop.f32.mrb[0].mxu0
    %v117 = vadd.f32 0.0, %v116
    %v118 = vpop.f32.mrb[0].mxu0
    %119 = vdwg.mxu0
    %120 = vmatprep.subr.mxu0 %v43
    %121 = vmatpush1.xpose.msra.mxu0 %v34
    %122 = vmatprep.subr.mxu0 0.0
    %123 = vmatpush1.xpose.msra.mxu0 0.0
    %124 = vmatprep.subr.mxu0 0.0
    %125 = vmatpush1.xpose.msra.mxu0 0.0
    %126 = vmatprep.subr.mxu0 0.0
    %127 = vmatpush1.xpose.msra.mxu0 0.0
    %128 = vmatprep.subr.mxu0 0.0
    %129 = vmatpush1.xpose.msra.mxu0 0.0
    %130 = vmatprep.subr.mxu0 0.0
    %131 = vmatpush1.xpose.msra.mxu0 0.0
    %132 = vmatprep.subr.mxu0 0.0
    %133 = vmatpush1.xpose.msra.mxu0 0.0
    %134 = vmatprep.subr.mxu0 0.0
    %135 = vmatpush1.xpose.msra.mxu0 0.0
    %136 = vmatprep.subr.mxu0 0.0
    %137 = vmatpush1.xpose.msra.mxu0 0.0
    %138 = vmatprep.subr.mxu0 0.0
    %139 = vmatpush1.xpose.msra.mxu0 0.0
    %140 = vmatprep.subr.mxu0 0.0
    %141 = vmatpush1.xpose.msra.mxu0 0.0
    %142 = vmatprep.subr.mxu0 0.0
    %143 = vmatpush1.xpose.msra.mxu0 0.0
    %144 = vmatprep.subr.mxu0 0.0
    %145 = vmatpush1.xpose.msra.mxu0 0.0
    %146 = vmatprep.subr.mxu0 0.0
    %147 = vmatpush1.xpose.msra.mxu0 0.0
    %148 = vmatprep.subr.mxu0 0.0
    %149 = vmatpush1.xpose.msra.mxu0 0.0
    %150 = vmatprep.subr.mxu0 0.0
    %151 = vmatpush1.xpose.msra.mxu0 0.0
    %152 = vmatprep.subr.mxu0 0.0
    %153 = vmatpush1.xpose.msra.mxu0 0.0
    %154 = vmatprep.subr.mxu0 0.0
    %155 = vmatpush1.xpose.msra.mxu0 0.0
    %156 = vmatprep.subr.mxu0 0.0
    %157 = vmatpush1.xpose.msra.mxu0 0.0
    %158 = vmatprep.subr.mxu0 0.0
    %159 = vmatpush1.xpose.msra.mxu0 0.0
    %160 = vmatprep.subr.mxu0 0.0
    %161 = vmatpush1.xpose.msra.mxu0 0.0
    %162 = vmatprep.subr.mxu0 0.0
    %163 = vmatpush1.xpose.msra.mxu0 0.0
    %164 = vmatprep.subr.mxu0 0.0
    %165 = vmatpush1.xpose.msra.mxu0 0.0
    %166 = vmatprep.subr.mxu0 0.0
    %167 = vmatpush1.xpose.msra.mxu0 0.0
    %168 = vmatprep.subr.mxu0 0.0
    %169 = vmatpush1.xpose.msra.mxu0 0.0
    %170 = vmatprep.subr.mxu0 0.0
    %171 = vmatpush1.xpose.msra.mxu0 0.0
    %172 = vmatprep.subr.mxu0 0.0
    %173 = vmatpush1.xpose.msra.mxu0 0.0
    %174 = vmatprep.subr.mxu0 0.0
    %175 = vmatpush1.xpose.msra.mxu0 0.0
    %176 = vmatprep.subr.mxu0 0.0
    %177 = vmatpush1.xpose.msra.mxu0 0.0
    %178 = vmatprep.subr.mxu0 0.0
    %179 = vmatpush1.xpose.msra.mxu0 0.0
    %180 = vmatprep.subr.mxu0 0.0
    %181 = vmatpush1.xpose.msra.mxu0 0.0
    %182 = vmatprep.subr.mxu0 0.0
    %183 = vmatpush1.xpose.msra.mxu0 0.0
    %184 = vmatprep.mubr.f32.mxu0 %v43
    %185 = vmatmul.mubr.f32.gmra.mrb[0].mxu0 %v34
    %v186 = vpop.f32.mrb[0].mxu0
    %v187 = vadd.f32 %v117, %v186
    %v188 = vpop.f32.mrb[0].mxu0
    %189 = vdwg.mxu0
    %190 = vmatprep.subr.mxu0 %v44
    %191 = vmatpush1.xpose.msra.mxu0 %v35
    %192 = vmatprep.subr.mxu0 0.0
    %193 = vmatpush1.xpose.msra.mxu0 0.0
    %194 = vmatprep.subr.mxu0 0.0
    %195 = vmatpush1.xpose.msra.mxu0 0.0
    %196 = vmatprep.subr.mxu0 0.0
    %197 = vmatpush1.xpose.msra.mxu0 0.0
    %198 = vmatprep.subr.mxu0 0.0
    %199 = vmatpush1.xpose.msra.mxu0 0.0
    %200 = vmatprep.subr.mxu0 0.0
    %201 = vmatpush1.xpose.msra.mxu0 0.0
    %202 = vmatprep.subr.mxu0 0.0
    %203 = vmatpush1.xpose.msra.mxu0 0.0
    %204 = vmatprep.subr.mxu0 0.0
    %205 = vmatpush1.xpose.msra.mxu0 0.0
    %206 = vmatprep.subr.mxu0 0.0
    %207 = vmatpush1.xpose.msra.mxu0 0.0
    %208 = vmatprep.subr.mxu0 0.0
    %209 = vmatpush1.xpose.msra.mxu0 0.0
    %210 = vmatprep.subr.mxu0 0.0
    %211 = vmatpush1.xpose.msra.mxu0 0.0
    %212 = vmatprep.subr.mxu0 0.0
    %213 = vmatpush1.xpose.msra.mxu0 0.0
    %214 = vmatprep.subr.mxu0 0.0
    %215 = vmatpush1.xpose.msra.mxu0 0.0
    %216 = vmatprep.subr.mxu0 0.0
    %217 = vmatpush1.xpose.msra.mxu0 0.0
    %218 = vmatprep.subr.mxu0 0.0
    %219 = vmatpush1.xpose.msra.mxu0 0.0
    %220 = vmatprep.subr.mxu0 0.0
    %221 = vmatpush1.xpose.msra.mxu0 0.0
    %222 = vmatprep.subr.mxu0 0.0
    %223 = vmatpush1.xpose.msra.mxu0 0.0
    %224 = vmatprep.subr.mxu0 0.0
    %225 = vmatpush1.xpose.msra.mxu0 0.0
    %226 = vmatprep.subr.mxu0 0.0
    %227 = vmatpush1.xpose.msra.mxu0 0.0
    %228 = vmatprep.subr.mxu0 0.0
    %229 = vmatpush1.xpose.msra.mxu0 0.0
    %230 = vmatprep.subr.mxu0 0.0
    %231 = vmatpush1.xpose.msra.mxu0 0.0
    %232 = vmatprep.subr.mxu0 0.0
    %233 = vmatpush1.xpose.msra.mxu0 0.0
    %234 = vmatprep.subr.mxu0 0.0
    %235 = vmatpush1.xpose.msra.mxu0 0.0
    %236 = vmatprep.subr.mxu0 0.0
    %237 = vmatpush1.xpose.msra.mxu0 0.0
    %238 = vmatprep.subr.mxu0 0.0
    %239 = vmatpush1.xpose.msra.mxu0 0.0
    %240 = vmatprep.subr.mxu0 0.0
    %241 = vmatpush1.xpose.msra.mxu0 0.0
    %242 = vmatprep.subr.mxu0 0.0
    %243 = vmatpush1.xpose.msra.mxu0 0.0
    %244 = vmatprep.subr.mxu0 0.0
    %245 = vmatpush1.xpose.msra.mxu0 0.0
    %246 = vmatprep.subr.mxu0 0.0
    %247 = vmatpush1.xpose.msra.mxu0 0.0
    %248 = vmatprep.subr.mxu0 0.0
    %249 = vmatpush1.xpose.msra.mxu0 0.0
    %250 = vmatprep.subr.mxu0 0.0
    %251 = vmatpush1.xpose.msra.mxu0 0.0
    %252 = vmatprep.subr.mxu0 0.0
    %253 = vmatpush1.xpose.msra.mxu0 0.0
    %254 = vmatprep.mubr.f32.mxu0 %v44
    %255 = vmatmul.mubr.f32.gmra.mrb[0].mxu0 %v35
    %v256 = vpop.f32.mrb[0].mxu0
    %v257 = vadd.f32 %v187, %v256
    %v258 = vpop.f32.mrb[0].mxu0
    %259 = vdwg.mxu0
    %260 = vmatprep.subr.mxu0 %v45
    %261 = vmatpush1.xpose.msra.mxu0 %v36
    %262 = vmatprep.subr.mxu0 0.0
    %263 = vmatpush1.xpose.msra.mxu0 0.0
    %264 = vmatprep.subr.mxu0 0.0
    %265 = vmatpush1.xpose.msra.mxu0 0.0
    %266 = vmatprep.subr.mxu0 0.0
    %267 = vmatpush1.xpose.msra.mxu0 0.0
    %268 = vmatprep.subr.mxu0 0.0
    %269 = vmatpush1.xpose.msra.mxu0 0.0
    %270 = vmatprep.subr.mxu0 0.0
    %271 = vmatpush1.xpose.msra.mxu0 0.0
    %272 = vmatprep.subr.mxu0 0.0
    %273 = vmatpush1.xpose.msra.mxu0 0.0
    %274 = vmatprep.subr.mxu0 0.0
    %275 = vmatpush1.xpose.msra.mxu0 0.0
    %276 = vmatprep.subr.mxu0 0.0
    %277 = vmatpush1.xpose.msra.mxu0 0.0
    %278 = vmatprep.subr.mxu0 0.0
    %279 = vmatpush1.xpose.msra.mxu0 0.0
    %280 = vmatprep.subr.mxu0 0.0
    %281 = vmatpush1.xpose.msra.mxu0 0.0
    %282 = vmatprep.subr.mxu0 0.0
    %283 = vmatpush1.xpose.msra.mxu0 0.0
    %284 = vmatprep.subr.mxu0 0.0
    %285 = vmatpush1.xpose.msra.mxu0 0.0
    %286 = vmatprep.subr.mxu0 0.0
    %287 = vmatpush1.xpose.msra.mxu0 0.0
    %288 = vmatprep.subr.mxu0 0.0
    %289 = vmatpush1.xpose.msra.mxu0 0.0
    %290 = vmatprep.subr.mxu0 0.0
    %291 = vmatpush1.xpose.msra.mxu0 0.0
    %292 = vmatprep.subr.mxu0 0.0
    %293 = vmatpush1.xpose.msra.mxu0 0.0
    %294 = vmatprep.subr.mxu0 0.0
    %295 = vmatpush1.xpose.msra.mxu0 0.0
    %296 = vmatprep.subr.mxu0 0.0
    %297 = vmatpush1.xpose.msra.mxu0 0.0
    %298 = vmatprep.subr.mxu0 0.0
    %299 = vmatpush1.xpose.msra.mxu0 0.0
    %300 = vmatprep.subr.mxu0 0.0
    %301 = vmatpush1.xpose.msra.mxu0 0.0
    %302 = vmatprep.subr.mxu0 0.0
    %303 = vmatpush1.xpose.msra.mxu0 0.0
    %304 = vmatprep.subr.mxu0 0.0
    %305 = vmatpush1.xpose.msra.mxu0 0.0
    %306 = vmatprep.subr.mxu0 0.0
    %307 = vmatpush1.xpose.msra.mxu0 0.0
    %308 = vmatprep.subr.mxu0 0.0
    %309 = vmatpush1.xpose.msra.mxu0 0.0
    %310 = vmatprep.subr.mxu0 0.0
    %311 = vmatpush1.xpose.msra.mxu0 0.0
    %312 = vmatprep.subr.mxu0 0.0
    %313 = vmatpush1.xpose.msra.mxu0 0.0
    %314 = vmatprep.subr.mxu0 0.0
    %315 = vmatpush1.xpose.msra.mxu0 0.0
    %316 = vmatprep.subr.mxu0 0.0
    %317 = vmatpush1.xpose.msra.mxu0 0.0
    %318 = vmatprep.subr.mxu0 0.0
    %319 = vmatpush1.xpose.msra.mxu0 0.0
    %320 = vmatprep.subr.mxu0 0.0
    %321 = vmatpush1.xpose.msra.mxu0 0.0
    %322 = vmatprep.subr.mxu0 0.0
    %323 = vmatpush1.xpose.msra.mxu0 0.0
    %324 = vmatprep.mubr.f32.mxu0 %v45
    %325 = vmatmul.mubr.f32.gmra.mrb[0].mxu0 %v36
    %v326 = vpop.f32.mrb[0].mxu0
    %v327 = vadd.f32 %v257, %v326
    %v328 = vpop.f32.mrb[0].mxu0
    %329 = vdwg.mxu0
    %v330 = vadd.f32 %v37, %v327
    %vm331 = vcmask 27648
    %332 = vst.msk [vmem:[#allocation5] sm:$0xf] %vm331, %v330
    // Predicated region
    $region14: #{tpu_custom_call.1} parent=1 // pred_check
      _
    $region15: #{tpu_custom_call.1} parent=1 // pred_check_branch
      %334 = sbr.rel (0) target = $region17
    $region16: #{tpu_custom_call.1} parent=1 // pred_region
      %s336 = ssub.s32 64, 64
      %337 = vsyncadd [#allocation4], %s336
      %s339 = sshll.u32 [#allocation5], 4
      %s340 = int_to_ptr.vmem [resolvable:$true] %s339
      %342 = dma.vmem_to_hbm [thread:$0]  %s340, 64, %s1, [#allocation4]
    $region17: #{tpu_custom_call.1} parent=1 // pred_fallthru
      _
    // Predicated region
    $region18: #{tpu_custom_call.1} parent=1 // pred_check
      _
    $region19: #{tpu_custom_call.1} parent=1 // pred_check_branch
      %344 = sbr.rel (0) target = $region21
    $region20: #{tpu_custom_call.1} parent=1 // pred_region
      %345 = dma.done [#allocation4], 64
    $region21: #{tpu_custom_call.1} parent=1 // pred_fallthru
      _
    %346 = vsyncpa [#allocation3], 1
    %347 = vsyncpa [#allocation4], 1

</llo_original>
